<compile_context>
chip_gen: v7x
topology: tpu7x:2x2x1
jax: 0.10.0
libtpu: 0.0.40
codegen_flags: <defaults>
</compile_context>

<pallas_src>
import jax
import jax.numpy as jnp
from jax.experimental import pallas as pl
from jax.experimental.pallas import tpu as pltpu


LANE_ALIGN = 256      # MXU pass width on v6e/v7x (multiple of v5e's 128 -> safe there)
SUBLANE_ALIGN = 8


def _round_up(x, m):
    return (x + m - 1) // m * m


def _vmem_budget_bytes():
    """~75% of per-core VMEM: headroom for compiler scratch / semaphores."""
    phys = 64 * 1024 * 1024  # conservative fallback = v7x per-TensorCore VMEM
    try:
        info = pltpu.get_tpu_info()
        phys = int(getattr(info, "vmem_capacity_bytes", phys)) or phys
    except Exception:
        pass
    return (phys * 3) // 4


def _choose_batch_tiling(N, tile_n_cap, prefer_two_tiles):
    """Pick (n_padded, tile_n, num_tiles) minimizing padding waste."""
    n8 = _round_up(max(N, SUBLANE_ALIGN), SUBLANE_ALIGN)
    tile_n_cap = max(SUBLANE_ALIGN, (tile_n_cap // SUBLANE_ALIGN) * SUBLANE_ALIGN)
    num = max(1, -(-n8 // tile_n_cap))
    if prefer_two_tiles and num == 1 and n8 >= 256:
        num = 2                      # let v7x's 2 TensorCores both get a batch tile
    tile_n = _round_up(-(-n8 // num), SUBLANE_ALIGN)
    return tile_n * num, tile_n, num


def _choose_hidden_tiling(h_p, tile_h_max):
    """tile_h is a LANE_ALIGN multiple that evenly divides h_p (no extra padding)."""
    blocks = h_p // LANE_ALIGN
    tile_h_max = max(LANE_ALIGN, tile_h_max)
    num = max(1, -(-h_p // tile_h_max))
    num = min(num, blocks)
    while num < blocks and blocks % num != 0:
        num += 1
    return (blocks // num) * LANE_ALIGN, num


# --------------------------------------------------------------------------
# Kernels
# --------------------------------------------------------------------------
def _mlp_kernel_resident(x_ref, w1_ref, b1_ref, w2_ref, b2_ref, o_ref):
    """Whole weights resident in VMEM; grid = (num_batch_tiles,)."""
    x = x_ref[...].astype(w1_ref.dtype)              # in-kernel cast (bf16 by default)
    h = jnp.dot(x, w1_ref[...], preferred_element_type=jnp.float32)
    h = jnp.maximum(h + b1_ref[...], 0.0)            # clamp(min=0) == ReLU, in f32
    o = jnp.dot(h.astype(w2_ref.dtype), w2_ref[...],
                preferred_element_type=jnp.float32) + b2_ref[...]
    o_ref[...] = o.astype(o_ref.dtype)


def _mlp_kernel_streamed(x_ref, w1_ref, b1_ref, w2_ref, b2_ref, o_ref, acc_ref):
    """grid = (num_batch_tiles, num_hidden_tiles); hidden axis is the reduction.

    D_in is fully contracted each step, so the per-hidden-tile ReLU is exact.
    """
    h_idx = pl.program_id(1)
    is_last = h_idx == pl.num_programs(1) - 1

    @pl.when(h_idx == 0)
    def _init():
        acc_ref[...] = jnp.zeros_like(acc_ref)

    x = x_ref[...].astype(w1_ref.dtype)
    h = jnp.dot(x, w1_ref[...], preferred_element_type=jnp.float32)
    h = jnp.maximum(h + b1_ref[...], 0.0)
    partial = jnp.dot(h.astype(w2_ref.dtype), w2_ref[...],
                      preferred_element_type=jnp.float32)

    @pl.when(jnp.logical_not(is_last))
    def _accumulate():
        acc_ref[...] += partial

    @pl.when(is_last)
    def _finalize():  # fold last partial + bias directly into the store
        o_ref[...] = (acc_ref[...] + partial + b2_ref[...]).astype(o_ref.dtype)


# --------------------------------------------------------------------------
# Wrappers
# --------------------------------------------------------------------------
def prepare_params(w1, b1, w2, b2, *, compute_dtype=jnp.bfloat16):
    """Pad feature dims to MXU-friendly multiples and cast weights ONCE.

    w1: (D_in, H), b1: (1, H) or (H,), w2: (H, D_out), b2: (1, D_out) or (D_out,).
    Biases stay f32 (bias add / ReLU are done in f32 inside the kernel).
    """
    D_in, H = w1.shape
    H2, D_out = w2.shape
    assert H == H2
    d_in_p = _round_up(D_in, LANE_ALIGN)
    h_p = _round_up(H, LANE_ALIGN)
    d_out_p = _round_up(D_out, LANE_ALIGN)

    wt_dtype = compute_dtype if compute_dtype is not None else w1.dtype
    w1_p = jnp.pad(w1.astype(wt_dtype), ((0, d_in_p - D_in), (0, h_p - H)))
    w2_p = jnp.pad(w2.astype(wt_dtype), ((0, h_p - H), (0, d_out_p - D_out)))
    b1_p = jnp.pad(jnp.reshape(b1, (1, H)).astype(jnp.float32),
                   ((0, 0), (0, h_p - H)))
    b2_p = jnp.pad(jnp.reshape(b2, (1, D_out)).astype(jnp.float32),
                   ((0, 0), (0, d_out_p - D_out)))
    meta = dict(D_in=D_in, H=H, D_out=D_out,
                d_in_p=d_in_p, h_p=h_p, d_out_p=d_out_p)
    return (w1_p, b1_p, w2_p, b2_p), meta


def two_layer_net_prepared(x, params_p, meta, *, tile_n_max=512, tile_h_max=1024,
                           vmem_budget=None, force_stream_weights=False):
    w1_p, b1_p, w2_p, b2_p = params_p
    N, D_in = x.shape
    assert D_in == meta["D_in"], "x feature dim does not match prepared weights"
    D_out = meta["D_out"]
    d_in_p, h_p, d_out_p = meta["d_in_p"], meta["h_p"], meta["d_out_p"]
    out_dtype = x.dtype

    if vmem_budget is None:
        vmem_budget = _vmem_budget_bytes()
    vmem_budget = int(vmem_budget)

    wt_itemsize = jnp.dtype(w1_p.dtype).itemsize
    wt_bytes = (w1_p.size + w2_p.size) * wt_itemsize + (b1_p.size + b2_p.size) * 4
    x_row_bytes = d_in_p * jnp.dtype(x.dtype).itemsize
    out_row_bytes = d_out_p * jnp.dtype(out_dtype).itemsize
    io_row_bytes = 2 * (x_row_bytes + out_row_bytes)      # double-buffered x/out tiles

    # ---- Fast path: whole (padded) weights resident in VMEM ------------------
    resident = (not force_stream_weights
                and 2 * wt_bytes + 128 * io_row_bytes <= vmem_budget)

    if resident:
        avail = vmem_budget - 2 * wt_bytes
        max_rows = max(SUBLANE_ALIGN,
                       (avail // io_row_bytes) // SUBLANE_ALIGN * SUBLANE_ALIGN)
        n_p, tile_n, num_n = _choose_batch_tiling(
            N, min(tile_n_max, max_rows), prefer_two_tiles=True)
        x_p = jnp.pad(x, ((0, n_p - N), (0, d_in_p - D_in)))

        out = pl.pallas_call(
            _mlp_kernel_resident,
            out_shape=jax.ShapeDtypeStruct((n_p, d_out_p), out_dtype),
            grid_spec=pltpu.PrefetchScalarGridSpec(
                num_scalar_prefetch=0,
                grid=(num_n,),
                in_specs=[
                    pl.BlockSpec((tile_n, d_in_p), lambda i: (i, 0)),   # x tile
                    pl.BlockSpec((d_in_p, h_p), lambda i: (0, 0)),      # W1 resident
                    pl.BlockSpec((1, h_p), lambda i: (0, 0)),           # b1 resident
                    pl.BlockSpec((h_p, d_out_p), lambda i: (0, 0)),     # W2 resident
                    pl.BlockSpec((1, d_out_p), lambda i: (0, 0)),       # b2 resident
                ],
                out_specs=pl.BlockSpec((tile_n, d_out_p), lambda i: (i, 0)),
            ),
            compiler_params=pltpu.CompilerParams(
                dimension_semantics=("parallel",),
                vmem_limit_bytes=vmem_budget,
            ),
        )(x_p, w1_p, b1_p, w2_p, b2_p)
        return out[:N, :D_out]

    # ---- Streamed path: hidden dim is an inner reduction axis ----------------
    tile_h, num_h = _choose_hidden_tiling(h_p, tile_h_max)

    def _fixed_bytes(th):  # double-buffered W1 col slice + W2 row slice + biases
        return (2 * (d_in_p * th + th * d_out_p) * wt_itemsize
                + 2 * (th + d_out_p) * 4)

    # Auto-shrink tile_h so untiled D_in/D_out still fit v7x's smaller VMEM.
    while _fixed_bytes(tile_h) > vmem_budget // 2 and tile_h > LANE_ALIGN:
        tile_h, num_h = _choose_hidden_tiling(h_p, tile_h - LANE_ALIGN)
    # TODO(synk): for extremely large D_in/D_out even tile_h=LANE_ALIGN may not fit
    # v7x VMEM; that case would need an additional reduction axis over D_in.

    per_row = io_row_bytes + 4 * d_out_p               # + f32 accumulator row
    avail = vmem_budget - _fixed_bytes(tile_h)
    max_rows = max(SUBLANE_ALIGN, (avail // per_row) // SUBLANE_ALIGN * SUBLANE_ALIGN)
    # Large batch tiles here: every W1/W2 byte is re-streamed num_n times.
    n_p, tile_n, num_n = _choose_batch_tiling(
        N, min(tile_n_max, max_rows), prefer_two_tiles=False)
    x_p = jnp.pad(x, ((0, n_p - N), (0, d_in_p - D_in)))

    out = pl.pallas_call(
        _mlp_kernel_streamed,
        out_shape=jax.ShapeDtypeStruct((n_p, d_out_p), out_dtype),
        grid_spec=pltpu.PrefetchScalarGridSpec(
            num_scalar_prefetch=0,
            grid=(num_n, num_h),
            in_specs=[
                pl.BlockSpec((tile_n, d_in_p), lambda i, h: (i, 0)),   # x tile (resident over h)
                pl.BlockSpec((d_in_p, tile_h), lambda i, h: (0, h)),   # W1 column slice
                pl.BlockSpec((1, tile_h), lambda i, h: (0, h)),        # b1 slice
                pl.BlockSpec((tile_h, d_out_p), lambda i, h: (h, 0)),  # W2 row slice
                pl.BlockSpec((1, d_out_p), lambda i, h: (0, 0)),       # b2 resident
            ],
            out_specs=pl.BlockSpec((tile_n, d_out_p), lambda i, h: (i, 0)),
            scratch_shapes=[pltpu.VMEM((tile_n, d_out_p), jnp.float32)],
        ),
        compiler_params=pltpu.CompilerParams(
            dimension_semantics=("parallel", "arbitrary"),
            vmem_limit_bytes=vmem_budget,
        ),
    )(x_p, w1_p, b1_p, w2_p, b2_p)
    return out[:N, :D_out]


def two_layer_net(x, w1, b1, w2, b2, *, compute_dtype=jnp.bfloat16, **kwargs):
    """Convenience wrapper: pads/casts weights then runs the kernel.

    For repeated calls with the same weights, call prepare_params() once and
    use two_layer_net_prepared() to avoid re-padding/re-casting every call.
    """
    params_p, meta = prepare_params(w1, b1, w2, b2, compute_dtype=compute_dtype)
    return two_layer_net_prepared(x, params_p, meta, **kwargs)


# --------------------------------------------------------------------------
# Reference / init
# --------------------------------------------------------------------------
def init_params(key, D_in, H, D_out, dtype=jnp.float32):
    """torch.nn.Linear-style init (uniform +/- 1/sqrt(fan_in)); weights stored
    pre-transposed relative to PyTorch's (out, in) layout."""
    k1, k2, k3, k4 = jax.random.split(key, 4)
    bound1 = 1.0 / jnp.sqrt(D_in)
    bound2 = 1.0 / jnp.sqrt(H)
    w1 = jax.random.uniform(k1, (D_in, H), dtype, -bound1, bound1)
    b1 = jax.random.uniform(k2, (1, H), dtype, -bound1, bound1)
    w2 = jax.random.uniform(k3, (H, D_out), dtype, -bound2, bound2)
    b2 = jax.random.uniform(k4, (1, D_out), dtype, -bound2, bound2)
    return w1, b1, w2, b2


def reference(x, w1, b1, w2, b2):
    h = jnp.maximum(x @ w1 + b1, 0.0)
    return h @ w2 + b2


if __name__ == "__main__":
    key = jax.random.PRNGKey(0)
    kx, kp, kx2, kp2 = jax.random.split(key, 4)

    # --- Small demo (resident-weights fast path) ---
    N, D_in, H, D_out = 8, 32, 64, 16
    x = jax.random.normal(kx, (N, D_in), jnp.float32)
    w1, b1, w2, b2 = init_params(kp, D_in, H, D_out)
    y_ref = reference(x, w1, b1, w2, b2)

    y_f32 = two_layer_net(x, w1, b1, w2, b2, compute_dtype=None)   # f32 check path
    jax.block_until_ready(y_f32)
    assert y_f32.shape == (N, D_out)
    assert jnp.allclose(y_f32, y_ref, atol=1e-5, rtol=1e-5)

    y_bf16 = two_layer_net(x, w1, b1, w2, b2)                      # bf16 MXU default
    jax.block_until_ready(y_bf16)
    assert jnp.allclose(y_bf16, y_ref, atol=2e-2, rtol=2e-2)

    # --- Larger, non-aligned case: prepare weights once and reuse ---
    N2, D_in2, H2, D_out2 = 640, 200, 1100, 80
    x2 = jax.random.normal(kx2, (N2, D_in2), jnp.float32)
    p2 = init_params(kp2, D_in2, H2, D_out2)
    y2_ref = reference(x2, *p2)

    params_p, meta = prepare_params(*p2)                           # pad + bf16-cast once
    y2 = two_layer_net_prepared(x2, params_p, meta)                # resident fast path
    jax.block_until_ready(y2)
    assert y2.shape == (N2, D_out2)
    assert jnp.allclose(y2, y2_ref, atol=2e-2, rtol=2e-2)

    # Exercise the streamed-weights / hidden-reduction kernel as well.
    y2s = two_layer_net_prepared(x2, params_p, meta,
                                 force_stream_weights=True, tile_h_max=256)
    jax.block_until_ready(y2s)
    assert jnp.allclose(y2s, y2_ref, atol=2e-2, rtol=2e-2)

    print("KERNEL_OK")
</pallas_src>

<mosaic_0001>
module attributes {stable_mosaic.version = 11 : i64} {
  func.func @_mlp_kernel_resident(%arg0: i32, %arg1: memref<8x256xf32, #tpu.memory_space<vmem>>, %arg2: memref<256x256xf32, #tpu.memory_space<vmem>>, %arg3: memref<1x256xf32, #tpu.memory_space<vmem>>, %arg4: memref<256x256xf32, #tpu.memory_space<vmem>>, %arg5: memref<1x256xf32, #tpu.memory_space<vmem>>, %arg6: memref<8x256xf32, #tpu.memory_space<vmem>>) attributes {dimension_semantics = [#tpu.dimension_semantics<parallel>], iteration_bounds = array<i64: 1>, scalar_prefetch = 0 : i64, scratch_operands = 0 : i64, tpu.core_type = #tpu.core_type<tc>, window_params = [{transform_indices = @transform_0, window_bounds = array<i64: 8, 256>}, {pipeline_mode = #tpu.pipeline_mode<synchronous>, transform_indices = @transform_1, window_bounds = array<i64: 256, 256>}, {pipeline_mode = #tpu.pipeline_mode<synchronous>, transform_indices = @transform_2, window_bounds = array<i64: 1, 256>}, {pipeline_mode = #tpu.pipeline_mode<synchronous>, transform_indices = @transform_3, window_bounds = array<i64: 256, 256>}, {pipeline_mode = #tpu.pipeline_mode<synchronous>, transform_indices = @transform_4, window_bounds = array<i64: 1, 256>}, {transform_indices = @transform_5, window_bounds = array<i64: 8, 256>}]} {
    %c0 = arith.constant 0 : index
    %c0_0 = arith.constant 0 : index
    %0 = vector.load %arg1[%c0, %c0_0] : memref<8x256xf32, #tpu.memory_space<vmem>>, vector<8x256xf32>
    %c0_1 = arith.constant 0 : index
    %c0_2 = arith.constant 0 : index
    %1 = vector.load %arg2[%c0_1, %c0_2] : memref<256x256xf32, #tpu.memory_space<vmem>>, vector<256x256xf32>
    %cst = arith.constant dense<0.000000e+00> : vector<8x256xf32>
    %2 = tpu.matmul %0, %1, %cst {dimension_numbers = #tpu.dot_dimension_numbers<[1], [0], [0], [1], [0, 0, 1, 1], [], []>} : vector<8x256xf32>, vector<256x256xf32>, vector<8x256xf32> -> vector<8x256xf32>
    %c0_3 = arith.constant 0 : index
    %c0_4 = arith.constant 0 : index
    %3 = vector.load %arg3[%c0_3, %c0_4] : memref<1x256xf32, #tpu.memory_space<vmem>>, vector<1x256xf32>
    %4 = vector.broadcast %3 : vector<1x256xf32> to vector<8x256xf32>
    %5 = arith.addf %2, %4 : vector<8x256xf32>
    %cst_5 = arith.constant 0.000000e+00 : f32
    %6 = vector.broadcast %cst_5 : f32 to vector<8x256xf32>
    %7 = arith.maximumf %5, %6 : vector<8x256xf32>
    %c0_6 = arith.constant 0 : index
    %c0_7 = arith.constant 0 : index
    %8 = vector.load %arg4[%c0_6, %c0_7] : memref<256x256xf32, #tpu.memory_space<vmem>>, vector<256x256xf32>
    %cst_8 = arith.constant dense<0.000000e+00> : vector<8x256xf32>
    %9 = tpu.matmul %7, %8, %cst_8 {dimension_numbers = #tpu.dot_dimension_numbers<[1], [0], [0], [1], [0, 0, 1, 1], [], []>} : vector<8x256xf32>, vector<256x256xf32>, vector<8x256xf32> -> vector<8x256xf32>
    %c0_9 = arith.constant 0 : index
    %c0_10 = arith.constant 0 : index
    %10 = vector.load %arg5[%c0_9, %c0_10] : memref<1x256xf32, #tpu.memory_space<vmem>>, vector<1x256xf32>
    %11 = vector.broadcast %10 : vector<1x256xf32> to vector<8x256xf32>
    %12 = arith.addf %9, %11 : vector<8x256xf32>
    %c0_11 = arith.constant 0 : index
    %c0_12 = arith.constant 0 : index
    %13 = vector.load %arg6[%c0_11, %c0_12] : memref<8x256xf32, #tpu.memory_space<vmem>>, vector<8x256xf32>
    tpu.vector_store %arg6[%c0_11, %c0_12], %12 {strides = array<i32>} : memref<8x256xf32, #tpu.memory_space<vmem>>, vector<8x256xf32>,
    return
  }
  func.func @transform_0(%arg0: i32) -> (i32, i32) {
    %c0_i32 = arith.constant 0 : i32
    %c0_i32_0 = arith.constant 0 : i32
    return %arg0, %c0_i32 : i32, i32
  }
  func.func @transform_1(%arg0: i32) -> (i32, i32) {
    %c0_i32 = arith.constant 0 : i32
    %c0_i32_0 = arith.constant 0 : i32
    %c0_i32_1 = arith.constant 0 : i32
    return %c0_i32, %c0_i32_0 : i32, i32
  }
  func.func @transform_2(%arg0: i32) -> (i32, i32) {
    %c0_i32 = arith.constant 0 : i32
    %c0_i32_0 = arith.constant 0 : i32
    %c0_i32_1 = arith.constant 0 : i32
    return %c0_i32, %c0_i32_0 : i32, i32
  }
  func.func @transform_3(%arg0: i32) -> (i32, i32) {
    %c0_i32 = arith.constant 0 : i32
    %c0_i32_0 = arith.constant 0 : i32
    %c0_i32_1 = arith.constant 0 : i32
    return %c0_i32, %c0_i32_0 : i32, i32
  }
  func.func @transform_4(%arg0: i32) -> (i32, i32) {
    %c0_i32 = arith.constant 0 : i32
    %c0_i32_0 = arith.constant 0 : i32
    %c0_i32_1 = arith.constant 0 : i32
    return %c0_i32, %c0_i32_0 : i32, i32
  }
  func.func @transform_5(%arg0: i32) -> (i32, i32) {
    %c0_i32 = arith.constant 0 : i32
    %c0_i32_0 = arith.constant 0 : i32
    return %arg0, %c0_i32 : i32, i32
  }
}

</mosaic_0001>

<llo_original>
// kernel: tpu_custom_call.1
$region0: #{tpu_custom_call.1}
  #allocation0 [shape = 'u32[]', space=smem, size = 0x4, offset = 0x4, fixed_abs, tag = 'smem constant byte address 0x4 - core index']
  #allocation1 [shape = 'u32[144,128]{1,0:T(1,128)}', space=vmem, size = 0x12000, scoped, tag = 'internal scratch']
  %s0 = inlined_call_operand.hbm [shape: f32[8,256], index: 0, kind: input, shape index: {}]
  %s1 = inlined_call_operand.hbm [shape: f32[256,256], index: 1, kind: input, shape index: {}]
  %s2 = inlined_call_operand.vmem [shape: f32[1,256], index: 2, kind: input, shape index: {}]
  %s3 = inlined_call_operand.hbm [shape: f32[256,256], index: 3, kind: input, shape index: {}]
  %s4 = inlined_call_operand.vmem [shape: f32[1,256], index: 4, kind: input, shape index: {}]
  %s5 = inlined_call_operand.hbm [shape: f32[8,256], index: 5, kind: output, shape index: {}]
  %s6 = sld [smem:[#allocation0]]
  $region42: #{tpu_custom_call.1} parent=0
    _
  %s8 = ssub.s32 1, %s6
  %s9 = scalar_select 0, %s8, %s6
  $region1: #{tpu_custom_call.1} parent=0
    #allocation2 [shape = 'u8[8192]{0}', space=vmem, size = 0x2000, scoped, tag = 'input window, operand 0, single buffered']
    #allocation3 [shape = 's32[1]{0}', space=sflag, size = 0x4, scoped, tag = 'scoped memory for tpu_custom_call.1']
    #allocation4 [shape = 's32[1]{0}', space=sflag, size = 0x4, scoped, tag = 'scoped memory for tpu_custom_call.1']
    #allocation5 [shape = 'u8[262144]{0}', space=vmem, size = 0x40000, scoped, tag = 'input window, operand 1, single buffered']
    #allocation6 [shape = 's32[1]{0}', space=sflag, size = 0x4, scoped, tag = 'scoped memory for tpu_custom_call.1']
    #allocation7 [shape = 'u8[262144]{0}', space=vmem, size = 0x40000, scoped, tag = 'input window, operand 3, single buffered']
    #allocation8 [shape = 'u8[8192]{0}', space=vmem, size = 0x2000, scoped, tag = 'output window, operand 0, single buffered']
    %10 = vsyncpa [#allocation3], 0
    %11 = vsyncpa [#allocation6], 0
    %12 = vsyncpa [#allocation4], 0
    // Predicated region
    $region2: #{tpu_custom_call.1} parent=1 // pred_check
      _
    $region3: #{tpu_custom_call.1} parent=1 // pred_check_branch
      %14 = sbr.rel (0) target = $region5
    $region4: #{tpu_custom_call.1} parent=1 // pred_region
      %s16 = ssub.s32 256, 256
      %17 = vsyncadd [#allocation3], %s16
      %s19 = sshll.u32 [#allocation2], 4
      %s20 = int_to_ptr.vmem [resolvable:$true] %s19
      %22 = dma.hbm_to_vmem [thread:$0]  %s0, 256, %s20, [#allocation3]
    $region5: #{tpu_custom_call.1} parent=1 // pred_fallthru
      _
    // Predicated region
    $region6: #{tpu_custom_call.1} parent=1 // pred_check
      _
    $region7: #{tpu_custom_call.1} parent=1 // pred_check_branch
      %24 = sbr.rel (0) target = $region9
    $region8: #{tpu_custom_call.1} parent=1 // pred_region
      %s26 = ssub.s32 8192, 8192
      %27 = vsyncadd [#allocation6], %s26
      %s28 = sshll.u32 [#allocation5], 4
      %s29 = int_to_ptr.vmem [resolvable:$true] %s28
      %34 = dma.hbm_to_vmem [thread:$0]  %s1, 8192, %s29, [#allocation6], 256, 256, 16
    $region9: #{tpu_custom_call.1} parent=1 // pred_fallthru
      _
    // Predicated region
    $region10: #{tpu_custom_call.1} parent=1 // pred_check
      _
    $region11: #{tpu_custom_call.1} parent=1 // pred_check_branch
      %36 = sbr.rel (0) target = $region13
    $region12: #{tpu_custom_call.1} parent=1 // pred_region
      _
    $region13: #{tpu_custom_call.1} parent=1 // pred_fallthru
      _
    // Predicated region
    $region14: #{tpu_custom_call.1} parent=1 // pred_check
      _
    $region15: #{tpu_custom_call.1} parent=1 // pred_check_branch
      %38 = sbr.rel (0) target = $region17
    $region16: #{tpu_custom_call.1} parent=1 // pred_region
      %s40 = ssub.s32 8192, 8192
      %41 = vsyncadd [#allocation6], %s40
      %s42 = sshll.u32 [#allocation7], 4
      %s43 = int_to_ptr.vmem [resolvable:$true] %s42
      %48 = dma.hbm_to_vmem [thread:$0]  %s3, 8192, %s43, [#allocation6], 256, 256, 16
    $region17: #{tpu_custom_call.1} parent=1 // pred_fallthru
      _
    // Predicated region
    $region18: #{tpu_custom_call.1} parent=1 // pred_check
      _
    $region19: #{tpu_custom_call.1} parent=1 // pred_check_branch
      %50 = sbr.rel (0) target = $region21
    $region20: #{tpu_custom_call.1} parent=1 // pred_region
      _
    $region21: #{tpu_custom_call.1} parent=1 // pred_fallthru
      _
    // Predicated region
    $region22: #{tpu_custom_call.1} parent=1 // pred_check
      _
    $region23: #{tpu_custom_call.1} parent=1 // pred_check_branch
      %52 = sbr.rel (0) target = $region25
    $region24: #{tpu_custom_call.1} parent=1 // pred_region
      %53 = dma.done [#allocation3], 256
    $region25: #{tpu_custom_call.1} parent=1 // pred_fallthru
      _
    // Predicated region
    $region26: #{tpu_custom_call.1} parent=1 // pred_check
      _
    $region27: #{tpu_custom_call.1} parent=1 // pred_check_branch
      %55 = sbr.rel (0) target = $region29
    $region28: #{tpu_custom_call.1} parent=1 // pred_region
      %56 = dma.done [#allocation6], 8192
    $region29: #{tpu_custom_call.1} parent=1 // pred_fallthru
      _
    // Predicated region
    $region30: #{tpu_custom_call.1} parent=1 // pred_check
      _
    $region31: #{tpu_custom_call.1} parent=1 // pred_check_branch
      %58 = sbr.rel (0) target = $region33
    $region32: #{tpu_custom_call.1} parent=1 // pred_region
      %59 = dma.done [#allocation6], 8192
    $region33: #{tpu_custom_call.1} parent=1 // pred_fallthru
      _
    %v60 = vld [vmem:[#allocation2] sm:$0xff]
    %v61 = vld [vmem:[#allocation2 + $0x8] sm:$0xff]
    %v62 = vld [vmem:[#allocation5] sm:$0xff]
    %v63 = vld [vmem:[#allocation5 + $0x8] sm:$0xff]
    %v64 = vld [vmem:[#allocation5 + $0x10] sm:$0xff]
    %v65 = vld [vmem:[#allocation5 + $0x18] sm:$0xff]
    %v66 = vld [vmem:[#allocation5 + $0x20] sm:$0xff]
    %v67 = vld [vmem:[#allocation5 + $0x28] sm:$0xff]
    %v68 = vld [vmem:[#allocation5 + $0x30] sm:$0xff]
    %v69 = vld [vmem:[#allocation5 + $0x38] sm:$0xff]
    %v70 = vld [vmem:[#allocation5 + $0x40] sm:$0xff]
    %v71 = vld [vmem:[#allocation5 + $0x48] sm:$0xff]
    %v72 = vld [vmem:[#allocation5 + $0x50] sm:$0xff]
    %v73 = vld [vmem:[#allocation5 + $0x58] sm:$0xff]
    %v74 = vld [vmem:[#allocation5 + $0x60] sm:$0xff]
    %v75 = vld [vmem:[#allocation5 + $0x68] sm:$0xff]
    %v76 = vld [vmem:[#allocation5 + $0x70] sm:$0xff]
    %v77 = vld [vmem:[#allocation5 + $0x78] sm:$0xff]
    %v78 = vld [vmem:[#allocation5 + $0x80] sm:$0xff]
    %v79 = vld [vmem:[#allocation5 + $0x88] sm:$0xff]
    %v80 = vld [vmem:[#allocation5 + $0x90] sm:$0xff]
    %v81 = vld [vmem:[#allocation5 + $0x98] sm:$0xff]
    %v82 = vld [vmem:[#allocation5 + $0xa0] sm:$0xff]
    %v83 = vld [vmem:[#allocation5 + $0xa8] sm:$0xff]
    %v84 = vld [vmem:[#allocation5 + $0xb0] sm:$0xff]
    %v85 = vld [vmem:[#allocation5 + $0xb8] sm:$0xff]
    %v86 = vld [vmem:[#allocation5 + $0xc0] sm:$0xff]
    %v87 = vld [vmem:[#allocation5 + $0xc8] sm:$0xff]
    %v88 = vld [vmem:[#allocation5 + $0xd0] sm:$0xff]
    %v89 = vld [vmem:[#allocation5 + $0xd8] sm:$0xff]
    %v90 = vld [vmem:[#allocation5 + $0xe0] sm:$0xff]
    %v91 = vld [vmem:[#allocation5 + $0xe8] sm:$0xff]
    %v92 = vld [vmem:[#allocation5 + $0xf0] sm:$0xff]
    %v93 = vld [vmem:[#allocation5 + $0xf8] sm:$0xff]
    %v94 = vld [vmem:[#allocation5 + $0x100] sm:$0xff]
    %v95 = vld [vmem:[#allocation5 + $0x108] sm:$0xff]
    %v96 = vld [vmem:[#allocation5 + $0x110] sm:$0xff]
    %v97 = vld [vmem:[#allocation5 + $0x118] sm:$0xff]
    %v98 = vld [vmem:[#allocation5 + $0x120] sm:$0xff]
    %v99 = vld [vmem:[#allocation5 + $0x128] sm:$0xff]
    %v100 = vld [vmem:[#allocation5 + $0x130] sm:$0xff]
    %v101 = vld [vmem:[#allocation5 + $0x138] sm:$0xff]
    %v102 = vld [vmem:[#allocation5 + $0x140] sm:$0xff]
    %v103 = vld [vmem:[#allocation5 + $0x148] sm:$0xff]
    %v104 = vld [vmem:[#allocation5 + $0x150] sm:$0xff]
    %v105 = vld [vmem:[#allocation5 + $0x158] sm:$0xff]
    %v106 = vld [vmem:[#allocation5 + $0x160] sm:$0xff]
    %v107 = vld [vmem:[#allocation5 + $0x168] sm:$0xff]
    %v108 = vld [vmem:[#allocation5 + $0x170] sm:$0xff]
    %v109 = vld [vmem:[#allocation5 + $0x178] sm:$0xff]
    %v110 = vld [vmem:[#allocation5 + $0x180] sm:$0xff]
    %v111 = vld [vmem:[#allocation5 + $0x188] sm:$0xff]
    %v112 = vld [vmem:[#allocation5 + $0x190] sm:$0xff]
    %v113 = vld [vmem:[#allocation5 + $0x198] sm:$0xff]
    %v114 = vld [vmem:[#allocation5 + $0x1a0] sm:$0xff]
    %v115 = vld [vmem:[#allocation5 + $0x1a8] sm:$0xff]
    %v116 = vld [vmem:[#allocation5 + $0x1b0] sm:$0xff]
    %v117 = vld [vmem:[#allocation5 + $0x1b8] sm:$0xff]
    %v118 = vld [vmem:[#allocation5 + $0x1c0] sm:$0xff]
    %v119 = vld [vmem:[#allocation5 + $0x1c8] sm:$0xff]
    %v120 = vld [vmem:[#allocation5 + $0x1d0] sm:$0xff]
    %v121 = vld [vmem:[#allocation5 + $0x1d8] sm:$0xff]
    %v122 = vld [vmem:[#allocation5 + $0x1e0] sm:$0xff]
    %v123 = vld [vmem:[#allocation5 + $0x1e8] sm:$0xff]
    %v124 = vld [vmem:[#allocation5 + $0x1f0] sm:$0xff]
    %v125 = vld [vmem:[#allocation5 + $0x1f8] sm:$0xff]
    %v126 = vld [vmem:[%s2] sm:$0x3]
    %v128 = vlaneseq
    %v129 = vshrl.u32 %v128, 7
    %v130 = vsub.s32 0, %v129
    %v131 = vrot.slane %v126, %v130
    %v132 = vlaneseq
    %v133 = vshrl.u32 %v132, 7
    %v134 = vsub.s32 1, %v133
    %v135 = vrot.slane %v126, %v134
    %138 = vmatprep.subr.mxu0 %v63
    %139 = vmatpush1.msra.mxu0 %v62
    %140 = vmatprep.subr.mxu0 %v65
    %141 = vmatpush1.msra.mxu0 %v64
    %142 = vmatprep.subr.mxu0 %v67
    %143 = vmatpush1.msra.mxu0 %v66
    %144 = vmatprep.subr.mxu0 %v69
    %145 = vmatpush1.msra.mxu0 %v68
    %146 = vmatprep.subr.mxu0 %v71
    %147 = vmatpush1.msra.mxu0 %v70
    %148 = vmatprep.subr.mxu0 %v73
    %149 = vmatpush1.msra.mxu0 %v72
    %150 = vmatprep.subr.mxu0 %v75
    %151 = vmatpush1.msra.mxu0 %v74
    %152 = vmatprep.subr.mxu0 %v77
    %153 = vmatpush1.msra.mxu0 %v76
    %154 = vmatprep.subr.mxu0 %v79
    %155 = vmatpush1.msra.mxu0 %v78
    %156 = vmatprep.subr.mxu0 %v81
    %157 = vmatpush1.msra.mxu0 %v80
    %158 = vmatprep.subr.mxu0 %v83
    %159 = vmatpush1.msra.mxu0 %v82
    %160 = vmatprep.subr.mxu0 %v85
    %161 = vmatpush1.msra.mxu0 %v84
    %162 = vmatprep.subr.mxu0 %v87
    %163 = vmatpush1.msra.mxu0 %v86
    %164 = vmatprep.subr.mxu0 %v89
    %165 = vmatpush1.msra.mxu0 %v88
    %166 = vmatprep.subr.mxu0 %v91
    %167 = vmatpush1.msra.mxu0 %v90
    %168 = vmatprep.subr.mxu0 %v93
    %169 = vmatpush1.msra.mxu0 %v92
    %170 = vmatprep.subr.mxu0 %v95
    %171 = vmatpush1.msra.mxu0 %v94
    %172 = vmatprep.subr.mxu0 %v97
    %173 = vmatpush1.msra.mxu0 %v96
    %174 = vmatprep.subr.mxu0 %v99
    %175 = vmatpush1.msra.mxu0 %v98
    %176 = vmatprep.subr.mxu0 %v101
    %177 = vmatpush1.msra.mxu0 %v100
    %178 = vmatprep.subr.mxu0 %v103
    %179 = vmatpush1.msra.mxu0 %v102
    %180 = vmatprep.subr.mxu0 %v105
    %181 = vmatpush1.msra.mxu0 %v104
    %182 = vmatprep.subr.mxu0 %v107
    %183 = vmatpush1.msra.mxu0 %v106
    %184 = vmatprep.subr.mxu0 %v109
    %185 = vmatpush1.msra.mxu0 %v108
    %186 = vmatprep.subr.mxu0 %v111
    %187 = vmatpush1.msra.mxu0 %v110
    %188 = vmatprep.subr.mxu0 %v113
    %189 = vmatpush1.msra.mxu0 %v112
    %190 = vmatprep.subr.mxu0 %v115
    %191 = vmatpush1.msra.mxu0 %v114
    %192 = vmatprep.subr.mxu0 %v117
    %193 = vmatpush1.msra.mxu0 %v116
    %194 = vmatprep.subr.mxu0 %v119
    %195 = vmatpush1.msra.mxu0 %v118
    %196 = vmatprep.subr.mxu0 %v121
    %197 = vmatpush1.msra.mxu0 %v120
    %198 = vmatprep.subr.mxu0 %v123
    %199 = vmatpush1.msra.mxu0 %v122
    %200 = vmatprep.subr.mxu0 %v125
    %201 = vmatpush1.msra.mxu0 %v124
    %202 = vmatprep.mubr.f32.mxu0 %v61
    %203 = vmatmul.mubr.f32.gmra.mrb[0].mxu0 %v60
    %v204 = vpop.f32.mrb[0].mxu0
    %v205 = vadd.f32 %v131, %v204
    %v206 = vpop.f32.mrb[0].mxu0
    %v207 = vadd.f32 %v135, %v206
    %208 = vdwg.mxu0
    %v209 = vmax.f32 %v205, 0.0
    %v210 = vmax.f32 %v207, 0.0
    %v211 = vld [vmem:[#allocation7] sm:$0xff]
    %v212 = vld [vmem:[#allocation7 + $0x8] sm:$0xff]
    %v213 = vld [vmem:[#allocation7 + $0x10] sm:$0xff]
    %v214 = vld [vmem:[#allocation7 + $0x18] sm:$0xff]
    %v215 = vld [vmem:[#allocation7 + $0x20] sm:$0xff]
    %v216 = vld [vmem:[#allocation7 + $0x28] sm:$0xff]
    %v217 = vld [vmem:[#allocation7 + $0x30] sm:$0xff]
    %v218 = vld [vmem:[#allocation7 + $0x38] sm:$0xff]
    %v219 = vld [vmem:[#allocation7 + $0x40] sm:$0xff]
    %v220 = vld [vmem:[#allocation7 + $0x48] sm:$0xff]
    %v221 = vld [vmem:[#allocation7 + $0x50] sm:$0xff]
    %v222 = vld [vmem:[#allocation7 + $0x58] sm:$0xff]
    %v223 = vld [vmem:[#allocation7 + $0x60] sm:$0xff]
    %v224 = vld [vmem:[#allocation7 + $0x68] sm:$0xff]
    %v225 = vld [vmem:[#allocation7 + $0x70] sm:$0xff]
    %v226 = vld [vmem:[#allocation7 + $0x78] sm:$0xff]
    %v227 = vld [vmem:[#allocation7 + $0x80] sm:$0xff]
    %v228 = vld [vmem:[#allocation7 + $0x88] sm:$0xff]
    %v229 = vld [vmem:[#allocation7 + $0x90] sm:$0xff]
    %v230 = vld [vmem:[#allocation7 + $0x98] sm:$0xff]
    %v231 = vld [vmem:[#allocation7 + $0xa0] sm:$0xff]
    %v232 = vld [vmem:[#allocation7 + $0xa8] sm:$0xff]
    %v233 = vld [vmem:[#allocation7 + $0xb0] sm:$0xff]
    %v234 = vld [vmem:[#allocation7 + $0xb8] sm:$0xff]
    %v235 = vld [vmem:[#allocation7 + $0xc0] sm:$0xff]
    %v236 = vld [vmem:[#allocation7 + $0xc8] sm:$0xff]
    %v237 = vld [vmem:[#allocation7 + $0xd0] sm:$0xff]
    %v238 = vld [vmem:[#allocation7 + $0xd8] sm:$0xff]
    %v239 = vld [vmem:[#allocation7 + $0xe0] sm:$0xff]
    %v240 = vld [vmem:[#allocation7 + $0xe8] sm:$0xff]
    %v241 = vld [vmem:[#allocation7 + $0xf0] sm:$0xff]
    %v242 = vld [vmem:[#allocation7 + $0xf8] sm:$0xff]
    %v243 = vld [vmem:[#allocation7 + $0x100] sm:$0xff]
    %v244 = vld [vmem:[#allocation7 + $0x108] sm:$0xff]
    %v245 = vld [vmem:[#allocation7 + $0x110] sm:$0xff]
    %v246 = vld [vmem:[#allocation7 + $0x118] sm:$0xff]
    %v247 = vld [vmem:[#allocation7 + $0x120] sm:$0xff]
    %v248 = vld [vmem:[#allocation7 + $0x128] sm:$0xff]
    %v249 = vld [vmem:[#allocation7 + $0x130] sm:$0xff]
    %v250 = vld [vmem:[#allocation7 + $0x138] sm:$0xff]
    %v251 = vld [vmem:[#allocation7 + $0x140] sm:$0xff]
    %v252 = vld [vmem:[#allocation7 + $0x148] sm:$0xff]
    %v253 = vld [vmem:[#allocation7 + $0x150] sm:$0xff]
    %v254 = vld [vmem:[#allocation7 + $0x158] sm:$0xff]
    %v255 = vld [vmem:[#allocation7 + $0x160] sm:$0xff]
    %v256 = vld [vmem:[#allocation7 + $0x168] sm:$0xff]
    %v257 = vld [vmem:[#allocation7 + $0x170] sm:$0xff]
    %v258 = vld [vmem:[#allocation7 + $0x178] sm:$0xff]
    %v259 = vld [vmem:[#allocation7 + $0x180] sm:$0xff]
    %v260 = vld [vmem:[#allocation7 + $0x188] sm:$0xff]
    %v261 = vld [vmem:[#allocation7 + $0x190] sm:$0xff]
    %v262 = vld [vmem:[#allocation7 + $0x198] sm:$0xff]
    %v263 = vld [vmem:[#allocation7 + $0x1a0] sm:$0xff]
    %v264 = vld [vmem:[#allocation7 + $0x1a8] sm:$0xff]
    %v265 = vld [vmem:[#allocation7 + $0x1b0] sm:$0xff]
    %v266 = vld [vmem:[#allocation7 + $0x1b8] sm:$0xff]
    %v267 = vld [vmem:[#allocation7 + $0x1c0] sm:$0xff]
    %v268 = vld [vmem:[#allocation7 + $0x1c8] sm:$0xff]
    %v269 = vld [vmem:[#allocation7 + $0x1d0] sm:$0xff]
    %v270 = vld [vmem:[#allocation7 + $0x1d8] sm:$0xff]
    %v271 = vld [vmem:[#allocation7 + $0x1e0] sm:$0xff]
    %v272 = vld [vmem:[#allocation7 + $0x1e8] sm:$0xff]
    %v273 = vld [vmem:[#allocation7 + $0x1f0] sm:$0xff]
    %v274 = vld [vmem:[#allocation7 + $0x1f8] sm:$0xff]
    %v275 = vld [vmem:[%s4] sm:$0x3]
    %v277 = vlaneseq
    %v278 = vshrl.u32 %v277, 7
    %v279 = vsub.s32 0, %v278
    %v280 = vrot.slane %v275, %v279
    %v281 = vlaneseq
    %v282 = vshrl.u32 %v281, 7
    %v283 = vsub.s32 1, %v282
    %v284 = vrot.slane %v275, %v283
    %287 = vmatprep.subr.mxu0 %v212
    %288 = vmatpush1.msra.mxu0 %v211
    %289 = vmatprep.subr.mxu0 %v214
    %290 = vmatpush1.msra.mxu0 %v213
    %291 = vmatprep.subr.mxu0 %v216
    %292 = vmatpush1.msra.mxu0 %v215
    %293 = vmatprep.subr.mxu0 %v218
    %294 = vmatpush1.msra.mxu0 %v217
    %295 = vmatprep.subr.mxu0 %v220
    %296 = vmatpush1.msra.mxu0 %v219
    %297 = vmatprep.subr.mxu0 %v222
    %298 = vmatpush1.msra.mxu0 %v221
    %299 = vmatprep.subr.mxu0 %v224
    %300 = vmatpush1.msra.mxu0 %v223
    %301 = vmatprep.subr.mxu0 %v226
    %302 = vmatpush1.msra.mxu0 %v225
    %303 = vmatprep.subr.mxu0 %v228
    %304 = vmatpush1.msra.mxu0 %v227
    %305 = vmatprep.subr.mxu0 %v230
    %306 = vmatpush1.msra.mxu0 %v229
    %307 = vmatprep.subr.mxu0 %v232
    %308 = vmatpush1.msra.mxu0 %v231
    %309 = vmatprep.subr.mxu0 %v234
    %310 = vmatpush1.msra.mxu0 %v233
    %311 = vmatprep.subr.mxu0 %v236
    %312 = vmatpush1.msra.mxu0 %v235
    %313 = vmatprep.subr.mxu0 %v238
    %314 = vmatpush1.msra.mxu0 %v237
    %315 = vmatprep.subr.mxu0 %v240
    %316 = vmatpush1.msra.mxu0 %v239
    %317 = vmatprep.subr.mxu0 %v242
    %318 = vmatpush1.msra.mxu0 %v241
    %319 = vmatprep.subr.mxu0 %v244
    %320 = vmatpush1.msra.mxu0 %v243
    %321 = vmatprep.subr.mxu0 %v246
    %322 = vmatpush1.msra.mxu0 %v245
    %323 = vmatprep.subr.mxu0 %v248
    %324 = vmatpush1.msra.mxu0 %v247
    %325 = vmatprep.subr.mxu0 %v250
    %326 = vmatpush1.msra.mxu0 %v249
    %327 = vmatprep.subr.mxu0 %v252
    %328 = vmatpush1.msra.mxu0 %v251
    %329 = vmatprep.subr.mxu0 %v254
    %330 = vmatpush1.msra.mxu0 %v253
    %331 = vmatprep.subr.mxu0 %v256
    %332 = vmatpush1.msra.mxu0 %v255
    %333 = vmatprep.subr.mxu0 %v258
    %334 = vmatpush1.msra.mxu0 %v257
    %335 = vmatprep.subr.mxu0 %v260
    %336 = vmatpush1.msra.mxu0 %v259
    %337 = vmatprep.subr.mxu0 %v262
    %338 = vmatpush1.msra.mxu0 %v261
    %339 = vmatprep.subr.mxu0 %v264
    %340 = vmatpush1.msra.mxu0 %v263
    %341 = vmatprep.subr.mxu0 %v266
    %342 = vmatpush1.msra.mxu0 %v265
    %343 = vmatprep.subr.mxu0 %v268
    %344 = vmatpush1.msra.mxu0 %v267
    %345 = vmatprep.subr.mxu0 %v270
    %346 = vmatpush1.msra.mxu0 %v269
    %347 = vmatprep.subr.mxu0 %v272
    %348 = vmatpush1.msra.mxu0 %v271
    %349 = vmatprep.subr.mxu0 %v274
    %350 = vmatpush1.msra.mxu0 %v273
    %351 = vmatprep.mubr.f32.mxu0 %v210
    %352 = vmatmul.mubr.f32.gmra.mrb[0].mxu0 %v209
    %v353 = vpop.f32.mrb[0].mxu0
    %v354 = vadd.f32 %v280, %v353
    %v355 = vpop.f32.mrb[0].mxu0
    %v356 = vadd.f32 %v284, %v355
    %357 = vdwg.mxu0
    %358 = vst [vmem:[#allocation8] sm:$0xff] %v354
    %359 = vst [vmem:[#allocation8 + $0x8] sm:$0xff] %v356
    // Predicated region
    $region34: #{tpu_custom_call.1} parent=1 // pred_check
      _
    $region35: #{tpu_custom_call.1} parent=1 // pred_check_branch
      %361 = sbr.rel (0) target = $region37
    $region36: #{tpu_custom_call.1} parent=1 // pred_region
      %s363 = ssub.s32 256, 256
      %364 = vsyncadd [#allocation4], %s363
      %s366 = sshll.u32 [#allocation8], 4
      %s367 = int_to_ptr.vmem [resolvable:$true] %s366
      %369 = dma.vmem_to_hbm [thread:$0]  %s367, 256, %s5, [#allocation4]
    $region37: #{tpu_custom_call.1} parent=1 // pred_fallthru
      _
    // Predicated region
    $region38: #{tpu_custom_call.1} parent=1 // pred_check
      _
    $region39: #{tpu_custom_call.1} parent=1 // pred_check_branch
      %371 = sbr.rel (0) target = $region41
    $region40: #{tpu_custom_call.1} parent=1 // pred_region
      %372 = dma.done [#allocation4], 256
    $region41: #{tpu_custom_call.1} parent=1 // pred_fallthru
      _
    %373 = vsyncpa [#allocation3], 1
    %374 = vsyncpa [#allocation6], 1
    %375 = vsyncpa [#allocation4], 1

</llo_original>
